<compile_context>
chip_gen: v7x
topology: tpu7x:2x2x1
jax: 0.10.0
libtpu: 0.0.40
codegen_flags: <defaults>
</compile_context>

<pallas_src>
import functools

import jax
import jax.numpy as jnp
from jax.experimental import pallas as pl
from jax.experimental.pallas import tpu as pltpu


def _local_block_kernel(x_ref, lane_ref, w_ref, shift_ref, o_ref, *,
                        ks, left, L, compute_dtype):
    # x_ref:     (1, C_in, P)   P = b_tile*L; lane p = b*L + l holds x[b, :, l]
    # lane_ref:  (1, P) int32   lane_ref[0, b*L + l] == l
    # w_ref:     (C_out, ks*C_in)  conv weight (tap-major rows), BN scale folded
    # shift_ref: (C_out, 1) f32    folded BN shift = beta - mean*scale
    # o_ref:     (1, C_out, P)
    P = x_ref.shape[-1]
    x = x_ref[0].astype(compute_dtype)          # cast once, right after load
    lane_l = lane_ref[...]                      # (1, P): position within each row
    zeros = jnp.zeros_like(x)                   # hoisted (no per-tap broadcasts)

    taps = []
    for k in range(ks):                         # static, small (ks taps)
        s = k - left                            # want result[:, p] = x[:, p + s]
        if s == 0:
            taps.append(x)
            continue
        rolled = pltpu.roll(x, (-s) % P, axis=1)          # XLU lane rotate
        valid = (lane_l >= -s) & (lane_l < L - s)         # 'same' zero-pad halo
        taps.append(jnp.where(valid, rolled, zeros))
    rhs = jnp.concatenate(taps, axis=0)                   # (ks*C_in, P)

    acc = jnp.dot(w_ref[...], rhs,
                  preferred_element_type=jnp.float32)     # (C_out, P), f32 acc
    y = acc + shift_ref[...]                              # BatchNorm(eval) shift
    y = y * jax.nn.sigmoid(y)                             # SiLU, f32 epilogue
    o_ref[0] = y.astype(o_ref.dtype)                      # one lane-dense store


def local_block_forward(x_ncl, weight_oik, gamma, beta, running_mean,
                        running_var, *, eps=1e-5,
                        compute_dtype=jnp.bfloat16, b_tile=None):
    """x_ncl: (N, C_in, L); weight_oik: (C_out, C_in, ks) (PyTorch layout)."""
    n, c_in, L = x_ncl.shape
    c_out, c_in_w, ks = weight_oik.shape
    assert c_in_w == c_in
    left = (ks - 1) // 2          # PyTorch 'same' split (odd ks; LegNet uses odd)

    # ---- trace-time BatchNorm(eval) folding (tiny tensors, no HBM pass on x) --
    scale = gamma / jnp.sqrt(running_var + eps)                       # (C_out,)
    shift = (beta - running_mean * scale).reshape(c_out, 1).astype(jnp.float32)
    # (C_out, C_in, ks) -> (C_out, ks, C_in) -> (C_out, ks*C_in): tap-major rows
    # matching the in-kernel tap concatenation; BN scale folded in.
    w_folded = (jnp.transpose(weight_oik, (0, 2, 1)).reshape(c_out, ks * c_in)
                * scale[:, None]).astype(compute_dtype)

    # ---- block sizing: lane-dense packed axis; >=2 grid steps when possible --
    if b_tile is None:
        lane_min = max(1, pl.cdiv(128, L))        # reach the 128-lane vreg width
        lane_tgt = max(lane_min, 512 // L)        # grow toward ~512-lane blocks
        b_tile = max(1, min(lane_tgt, max(lane_min, n // 2)))
    nb = pl.cdiv(n, b_tile)
    n_pad = nb * b_tile
    P = b_tile * L

    # ---- wrapper-side layout plumbing (present lane-dense slabs to the kernel)
    xp = x_ncl
    if n_pad != n:
        xp = jnp.pad(xp, ((0, n_pad - n), (0, 0), (0, 0)))
    xp = xp.reshape(nb, b_tile, c_in, L).transpose(0, 2, 1, 3).reshape(nb, c_in, P)
    lane_l = jnp.tile(jnp.arange(L, dtype=jnp.int32), b_tile).reshape(1, P)

    kernel = functools.partial(_local_block_kernel, ks=ks, left=left, L=L,
                               compute_dtype=compute_dtype)

    out_packed = pl.pallas_call(
        kernel,
        out_shape=jax.ShapeDtypeStruct((nb, c_out, P), x_ncl.dtype),
        grid_spec=pltpu.PrefetchScalarGridSpec(
            num_scalar_prefetch=0,
            grid=(nb,),
            in_specs=[
                pl.BlockSpec((1, c_in, P), lambda i: (i, 0, 0)),
                pl.BlockSpec((1, P), lambda i: (0, 0)),
                pl.BlockSpec((c_out, ks * c_in), lambda i: (0, 0)),
                pl.BlockSpec((c_out, 1), lambda i: (0, 0)),
            ],
            out_specs=pl.BlockSpec((1, c_out, P), lambda i: (i, 0, 0)),
        ),
        compiler_params=pltpu.CompilerParams(
            dimension_semantics=("parallel",)),
    )(xp, lane_l, w_folded, shift)

    out = (out_packed.reshape(nb, c_out, b_tile, L)
           .transpose(0, 2, 1, 3).reshape(n_pad, c_out, L))
    return out[:n] if n_pad != n else out


def _reference(x_ncl, weight_oik, gamma, beta, running_mean, running_var,
               eps=1e-5):
    """Plain-JAX reference of Conv1d('same', no bias) -> BN(eval) -> SiLU."""
    c_out, c_in, ks = weight_oik.shape
    total = ks - 1
    left = total // 2
    x_pad = jnp.pad(x_ncl, ((0, 0), (0, 0), (left, total - left)))
    y = jax.lax.conv_general_dilated(
        x_pad, weight_oik, window_strides=(1,), padding="VALID",
        dimension_numbers=("NCH", "OIH", "NCH"),
        precision=jax.lax.Precision.HIGHEST)
    scale = (gamma / jnp.sqrt(running_var + eps))[None, :, None]
    shift = (beta - running_mean * gamma / jnp.sqrt(running_var + eps))[None, :, None]
    y = y * scale + shift
    return y * jax.nn.sigmoid(y)


if __name__ == "__main__":
    # Small shapes consistent with LocalBlock(in_ch=4, ks=5, nn.SiLU, out_ch=8)
    N, C_IN, C_OUT, KS, L = 2, 4, 8, 5, 16

    key = jax.random.PRNGKey(0)
    kx, kw, kg, kb, km, kv = jax.random.split(key, 6)

    x = jax.random.normal(kx, (N, C_IN, L), dtype=jnp.float32)           # NCL
    weight = jax.random.normal(kw, (C_OUT, C_IN, KS), dtype=jnp.float32) * 0.2
    gamma = 1.0 + 0.1 * jax.random.normal(kg, (C_OUT,), dtype=jnp.float32)
    beta = 0.1 * jax.random.normal(kb, (C_OUT,), dtype=jnp.float32)
    running_mean = 0.1 * jax.random.normal(km, (C_OUT,), dtype=jnp.float32)
    running_var = jnp.abs(jax.random.normal(kv, (C_OUT,), dtype=jnp.float32)) + 0.5

    ref = _reference(x, weight, gamma, beta, running_mean, running_var)

    # f32 MXU operands (tight check)
    out_f32 = local_block_forward(x, weight, gamma, beta, running_mean,
                                  running_var, compute_dtype=jnp.float32)
    out_f32 = jax.block_until_ready(out_f32)
    assert out_f32.shape == (N, C_OUT, L)
    assert jnp.allclose(out_f32, ref, atol=1e-4, rtol=1e-4), "f32 mismatch vs reference"

    # default path: bf16 MXU operands, f32 accumulate + f32 epilogue
    out_bf16 = local_block_forward(x, weight, gamma, beta, running_mean,
                                   running_var)
    out_bf16 = jax.block_until_ready(out_bf16)
    assert jnp.allclose(out_bf16, ref, atol=5e-2, rtol=5e-2), "bf16-compute mismatch"

    # end-to-end bf16 HBM data path (bf16 activations in, bf16 out)
    out_e2e = local_block_forward(x.astype(jnp.bfloat16), weight, gamma, beta,
                                  running_mean, running_var)
    out_e2e = jax.block_until_ready(out_e2e)
    assert out_e2e.dtype == jnp.bfloat16
    assert jnp.allclose(out_e2e.astype(jnp.float32), ref,
                        atol=1e-1, rtol=1e-1), "bf16 end-to-end mismatch"

    print("KERNEL_OK")
</pallas_src>

<mosaic_0001>
module attributes {stable_mosaic.version = 11 : i64} {
  func.func @_local_block_kernel(%arg0: i32, %arg1: memref<1x4x128xf32, #tpu.memory_space<vmem>>, %arg2: memref<1x128xi32, #tpu.memory_space<vmem>>, %arg3: memref<8x20xf32, #tpu.memory_space<vmem>>, %arg4: memref<8x1xf32, #tpu.memory_space<vmem>>, %arg5: memref<1x8x128xf32, #tpu.memory_space<vmem>>) attributes {dimension_semantics = [#tpu.dimension_semantics<parallel>], iteration_bounds = array<i64: 1>, scalar_prefetch = 0 : i64, scratch_operands = 0 : i64, tpu.core_type = #tpu.core_type<tc>, window_params = [{transform_indices = @transform_0, window_bounds = array<i64: 1, 4, 128>}, {pipeline_mode = #tpu.pipeline_mode<synchronous>, transform_indices = @transform_1, window_bounds = array<i64: 1, 128>}, {pipeline_mode = #tpu.pipeline_mode<synchronous>, transform_indices = @transform_2, window_bounds = array<i64: 8, 20>}, {pipeline_mode = #tpu.pipeline_mode<synchronous>, transform_indices = @transform_3, window_bounds = array<i64: 8, 1>}, {transform_indices = @transform_4, window_bounds = array<i64: 1, 8, 128>}]} {
    %c0 = arith.constant 0 : index
    %c0_0 = arith.constant 0 : index
    %c0_1 = arith.constant 0 : index
    %0 = vector.load %arg1[%c0, %c0_0, %c0_1] : memref<1x4x128xf32, #tpu.memory_space<vmem>>, vector<1x4x128xf32>
    %1 = vector.shape_cast %0 : vector<1x4x128xf32> to vector<4x128xf32>
    %c0_2 = arith.constant 0 : index
    %c0_3 = arith.constant 0 : index
    %2 = vector.load %arg2[%c0_2, %c0_3] : memref<1x128xi32, #tpu.memory_space<vmem>>, vector<1x128xi32>
    %cst = arith.constant 0.000000e+00 : f32
    %3 = vector.broadcast %cst : f32 to vector<4x128xf32>
    %c2_i32 = arith.constant 2 : i32
    %4 = tpu.dynamic_rotate %1 by %c2_i32 dim 1 : vector<4x128xf32>, i32 -> vector<4x128xf32>
    %c2_i32_4 = arith.constant 2 : i32
    %5 = vector.broadcast %c2_i32_4 : i32 to vector<1x128xi32>
    %6 = arith.cmpi sge, %2, %5 : vector<1x128xi32>
    %c18_i32 = arith.constant 18 : i32
    %7 = vector.broadcast %c18_i32 : i32 to vector<1x128xi32>
    %8 = arith.cmpi slt, %2, %7 : vector<1x128xi32>
    %9 = arith.andi %6, %8 : vector<1x128xi1>
    %10 = vector.shape_cast %9 : vector<1x128xi1> to vector<1x128xi1>
    %11 = vector.broadcast %10 : vector<1x128xi1> to vector<4x128xi1>
    %12 = arith.select %11, %4, %3 : vector<4x128xi1>, vector<4x128xf32>
    %c1_i32 = arith.constant 1 : i32
    %13 = tpu.dynamic_rotate %1 by %c1_i32 dim 1 : vector<4x128xf32>, i32 -> vector<4x128xf32>
    %c1_i32_5 = arith.constant 1 : i32
    %14 = vector.broadcast %c1_i32_5 : i32 to vector<1x128xi32>
    %15 = arith.cmpi sge, %2, %14 : vector<1x128xi32>
    %c17_i32 = arith.constant 17 : i32
    %16 = vector.broadcast %c17_i32 : i32 to vector<1x128xi32>
    %17 = arith.cmpi slt, %2, %16 : vector<1x128xi32>
    %18 = arith.andi %15, %17 : vector<1x128xi1>
    %19 = vector.shape_cast %18 : vector<1x128xi1> to vector<1x128xi1>
    %20 = vector.broadcast %19 : vector<1x128xi1> to vector<4x128xi1>
    %21 = arith.select %20, %13, %3 : vector<4x128xi1>, vector<4x128xf32>
    %c127_i32 = arith.constant 127 : i32
    %22 = tpu.dynamic_rotate %1 by %c127_i32 dim 1 : vector<4x128xf32>, i32 -> vector<4x128xf32>
    %c-1_i32 = arith.constant -1 : i32
    %23 = vector.broadcast %c-1_i32 : i32 to vector<1x128xi32>
    %24 = arith.cmpi sge, %2, %23 : vector<1x128xi32>
    %c15_i32 = arith.constant 15 : i32
    %25 = vector.broadcast %c15_i32 : i32 to vector<1x128xi32>
    %26 = arith.cmpi slt, %2, %25 : vector<1x128xi32>
    %27 = arith.andi %24, %26 : vector<1x128xi1>
    %28 = vector.shape_cast %27 : vector<1x128xi1> to vector<1x128xi1>
    %29 = vector.broadcast %28 : vector<1x128xi1> to vector<4x128xi1>
    %30 = arith.select %29, %22, %3 : vector<4x128xi1>, vector<4x128xf32>
    %c126_i32 = arith.constant 126 : i32
    %31 = tpu.dynamic_rotate %1 by %c126_i32 dim 1 : vector<4x128xf32>, i32 -> vector<4x128xf32>
    %c-2_i32 = arith.constant -2 : i32
    %32 = vector.broadcast %c-2_i32 : i32 to vector<1x128xi32>
    %33 = arith.cmpi sge, %2, %32 : vector<1x128xi32>
    %c14_i32 = arith.constant 14 : i32
    %34 = vector.broadcast %c14_i32 : i32 to vector<1x128xi32>
    %35 = arith.cmpi slt, %2, %34 : vector<1x128xi32>
    %36 = arith.andi %33, %35 : vector<1x128xi1>
    %37 = vector.shape_cast %36 : vector<1x128xi1> to vector<1x128xi1>
    %38 = vector.broadcast %37 : vector<1x128xi1> to vector<4x128xi1>
    %39 = arith.select %38, %31, %3 : vector<4x128xi1>, vector<4x128xf32>
    %40 = tpu.concatenate %12, %21, %1, %30, %39 in 0 : vector<4x128xf32>, vector<4x128xf32>, vector<4x128xf32>, vector<4x128xf32>, vector<4x128xf32> -> vector<20x128xf32>
    %c0_6 = arith.constant 0 : index
    %c0_7 = arith.constant 0 : index
    %41 = vector.load %arg3[%c0_6, %c0_7] : memref<8x20xf32, #tpu.memory_space<vmem>>, vector<8x20xf32>
    %cst_8 = arith.constant dense<0.000000e+00> : vector<8x128xf32>
    %42 = tpu.matmul %41, %40, %cst_8 {dimension_numbers = #tpu.dot_dimension_numbers<[1], [0], [0], [1], [0, 0, 1, 1], [], []>} : vector<8x20xf32>, vector<20x128xf32>, vector<8x128xf32> -> vector<8x128xf32>
    %c0_9 = arith.constant 0 : index
    %c0_10 = arith.constant 0 : index
    %43 = vector.load %arg4[%c0_9, %c0_10] : memref<8x1xf32, #tpu.memory_space<vmem>>, vector<8x1xf32>
    %44 = vector.broadcast %43 : vector<8x1xf32> to vector<8x128xf32>
    %45 = arith.addf %42, %44 : vector<8x128xf32>
    %46 = arith.negf %45 : vector<8x128xf32>
    %47 = math.exp %46 : vector<8x128xf32>
    %cst_11 = arith.constant 1.000000e+00 : f32
    %48 = vector.broadcast %cst_11 : f32 to vector<8x128xf32>
    %49 = arith.addf %48, %47 : vector<8x128xf32>
    %50 = arith.divf %48, %49 : vector<8x128xf32>
    %51 = arith.mulf %45, %50 : vector<8x128xf32>
    %c0_12 = arith.constant 0 : index
    %c0_13 = arith.constant 0 : index
    %c0_14 = arith.constant 0 : index
    %52 = vector.load %arg5[%c0_12, %c0_13, %c0_14] : memref<1x8x128xf32, #tpu.memory_space<vmem>>, vector<1x8x128xf32>
    %53 = vector.shape_cast %52 : vector<1x8x128xf32> to vector<8x128xf32>
    %54 = vector.shape_cast %51 : vector<8x128xf32> to vector<1x8x128xf32>
    tpu.vector_store %arg5[%c0_12, %c0_13, %c0_14], %54 {strides = array<i32>} : memref<1x8x128xf32, #tpu.memory_space<vmem>>, vector<1x8x128xf32>,
    return
  }
  func.func @transform_0(%arg0: i32) -> (i32, i32, i32) {
    %c0_i32 = arith.constant 0 : i32
    %c0_i32_0 = arith.constant 0 : i32
    %c0_i32_1 = arith.constant 0 : i32
    return %arg0, %c0_i32, %c0_i32_0 : i32, i32, i32
  }
  func.func @transform_1(%arg0: i32) -> (i32, i32) {
    %c0_i32 = arith.constant 0 : i32
    %c0_i32_0 = arith.constant 0 : i32
    %c0_i32_1 = arith.constant 0 : i32
    return %c0_i32, %c0_i32_0 : i32, i32
  }
  func.func @transform_2(%arg0: i32) -> (i32, i32) {
    %c0_i32 = arith.constant 0 : i32
    %c0_i32_0 = arith.constant 0 : i32
    %c0_i32_1 = arith.constant 0 : i32
    return %c0_i32, %c0_i32_0 : i32, i32
  }
  func.func @transform_3(%arg0: i32) -> (i32, i32) {
    %c0_i32 = arith.constant 0 : i32
    %c0_i32_0 = arith.constant 0 : i32
    %c0_i32_1 = arith.constant 0 : i32
    return %c0_i32, %c0_i32_0 : i32, i32
  }
  func.func @transform_4(%arg0: i32) -> (i32, i32, i32) {
    %c0_i32 = arith.constant 0 : i32
    %c0_i32_0 = arith.constant 0 : i32
    %c0_i32_1 = arith.constant 0 : i32
    return %arg0, %c0_i32, %c0_i32_0 : i32, i32, i32
  }
}

</mosaic_0001>

<llo_original>
// kernel: tpu_custom_call.1
$region0: #{tpu_custom_call.1}
  #allocation0 [shape = 'u32[]', space=smem, size = 0x4, offset = 0x4, fixed_abs, tag = 'smem constant byte address 0x4 - core index']
  #allocation1 [shape = 'u32[144,128]{1,0:T(1,128)}', space=vmem, size = 0x12000, scoped, tag = 'internal scratch']
  %s0 = inlined_call_operand.vmem [shape: f32[1,4,128], index: 0, kind: input, shape index: {}]
  %s1 = inlined_call_operand.vmem [shape: s32[1,128], index: 1, kind: input, shape index: {}]
  %s2 = inlined_call_operand.vmem [shape: f32[8,20], index: 2, kind: input, shape index: {}]
  %s3 = inlined_call_operand.vmem [shape: f32[8,1], index: 3, kind: input, shape index: {}]
  %s4 = inlined_call_operand.hbm [shape: f32[1,8,128], index: 4, kind: output, shape index: {}]
  %s5 = sld [smem:[#allocation0]]
  $region26: #{tpu_custom_call.1} parent=0
    _
  %s7 = ssub.s32 1, %s5
  %s8 = scalar_select 0, %s7, %s5
  $region1: #{tpu_custom_call.1} parent=0
    #allocation2 [shape = 'u8[4096]{0}', space=vmem, size = 0x1000, scoped, tag = 'output window, operand 0, single buffered']
    #allocation3 [shape = 's32[1]{0}', space=sflag, size = 0x4, scoped, tag = 'scoped memory for tpu_custom_call.1']
    %9 = vsyncpa [#allocation3], 0
    // Predicated region
    $region2: #{tpu_custom_call.1} parent=1 // pred_check
      _
    $region3: #{tpu_custom_call.1} parent=1 // pred_check_branch
      %11 = sbr.rel (0) target = $region5
    $region4: #{tpu_custom_call.1} parent=1 // pred_region
      _
    $region5: #{tpu_custom_call.1} parent=1 // pred_fallthru
      _
    // Predicated region
    $region6: #{tpu_custom_call.1} parent=1 // pred_check
      _
    $region7: #{tpu_custom_call.1} parent=1 // pred_check_branch
      %13 = sbr.rel (0) target = $region9
    $region8: #{tpu_custom_call.1} parent=1 // pred_region
      _
    $region9: #{tpu_custom_call.1} parent=1 // pred_fallthru
      _
    // Predicated region
    $region10: #{tpu_custom_call.1} parent=1 // pred_check
      _
    $region11: #{tpu_custom_call.1} parent=1 // pred_check_branch
      %15 = sbr.rel (0) target = $region13
    $region12: #{tpu_custom_call.1} parent=1 // pred_region
      _
    $region13: #{tpu_custom_call.1} parent=1 // pred_fallthru
      _
    // Predicated region
    $region14: #{tpu_custom_call.1} parent=1 // pred_check
      _
    $region15: #{tpu_custom_call.1} parent=1 // pred_check_branch
      %17 = sbr.rel (0) target = $region17
    $region16: #{tpu_custom_call.1} parent=1 // pred_region
      _
    $region17: #{tpu_custom_call.1} parent=1 // pred_fallthru
      _
    %v18 = vld [vmem:[%s0] sm:$0xf]
    %v19 = vld [vmem:[%s1] sm:$0x1]
    %20 = vrot.lane.b32.xlu0 %v18, 2
    %v21 = vpop.permute.xlu0 %20
    %vm22 = vcmp.ge.s32.totalorder %v19, 2
    %vm23 = vcmp.lt.s32.totalorder %v19, 18
    %vm24 = vmand %vm22, %vm23
    %v25 = vsel %vm24, 1, 0
    %v26 = vlaneseq
    %v27 = vshrl.u32 %v26, 7
    %v28 = vsub.s32 0, %v27
    %v29 = vrot.slane %v25, %v28
    %vm30 = vcmp.eq.s32.totalorder %v29, 1
    %v31 = vsel %vm30, %v21, 0.0
    %32 = vrot.lane.b32.xlu0 %v18, 1
    %v33 = vpop.permute.xlu0 %32
    %vm34 = vcmp.ge.s32.totalorder %v19, 1
    %vm35 = vcmp.lt.s32.totalorder %v19, 17
    %vm36 = vmand %vm34, %vm35
    %v37 = vsel %vm36, 1, 0
    %v38 = vlaneseq
    %v39 = vshrl.u32 %v38, 7
    %v40 = vsub.s32 0, %v39
    %v41 = vrot.slane %v37, %v40
    %vm42 = vcmp.eq.s32.totalorder %v41, 1
    %v43 = vsel %vm42, %v33, 0.0
    %44 = vrot.lane.b32.xlu0 %v18, 127
    %v45 = vpop.permute.xlu0 %44
    %vm46 = vcmp.ge.s32.totalorder %v19, 4294967295
    %vm47 = vcmp.lt.s32.totalorder %v19, 15
    %vm48 = vmand %vm46, %vm47
    %v49 = vsel %vm48, 1, 0
    %v50 = vlaneseq
    %v51 = vshrl.u32 %v50, 7
    %v52 = vsub.s32 0, %v51
    %v53 = vrot.slane %v49, %v52
    %vm54 = vcmp.eq.s32.totalorder %v53, 1
    %v55 = vsel %vm54, %v45, 0.0
    %56 = vrot.lane.b32.xlu0 %v18, 126
    %v57 = vpop.permute.xlu0 %56
    %vm58 = vcmp.ge.s32.totalorder %v19, 4294967294
    %vm59 = vcmp.lt.s32.totalorder %v19, 14
    %vm60 = vmand %vm58, %vm59
    %v61 = vsel %vm60, 1, 0
    %v62 = vlaneseq
    %v63 = vshrl.u32 %v62, 7
    %v64 = vsub.s32 0, %v63
    %v65 = vrot.slane %v61, %v64
    %vm66 = vcmp.eq.s32.totalorder %v65, 1
    %v67 = vsel %vm66, %v57, 0.0
    %v69 = vrot.slane %v43, 4
    %v72 = vrot.slane %v55, 4
    %vm74 = vcmask 1043456
    %v75 = vsel %vm74, %v31, %v69
    %v76 = vsel %vm74, %v18, %v72
    %v77 = vld [vmem:[%s2] sm:$0xff]
    %v78 = vld [vmem:[%s3] sm:$0xff]
    %80 = vset.pattern.permute.xlu0 0
    %81 = vperm.xlu0 %80, %v78
    %v82 = vpop.permute.xlu0 %81
    %vm84 = vcmask 162816
    %v86 = vsel %vm84, %v77, 0
    %v89 = vsel %vm74, %v67, 0
    %91 = vmatprep.subr.mxu0 0.0
    %92 = vmatpush1.msra.mxu0 %v75
    %93 = vmatprep.subr.mxu0 0.0
    %94 = vmatpush1.msra.mxu0 %v76
    %95 = vmatprep.subr.mxu0 0.0
    %96 = vmatpush1.msra.mxu0 %v89
    %97 = vmatprep.subr.mxu0 0.0
    %98 = vmatpush1.msra.mxu0 0.0
    %99 = vmatprep.subr.mxu0 0.0
    %100 = vmatpush1.msra.mxu0 0.0
    %101 = vmatprep.subr.mxu0 0.0
    %102 = vmatpush1.msra.mxu0 0.0
    %103 = vmatprep.subr.mxu0 0.0
    %104 = vmatpush1.msra.mxu0 0.0
    %105 = vmatprep.subr.mxu0 0.0
    %106 = vmatpush1.msra.mxu0 0.0
    %107 = vmatprep.subr.mxu0 0.0
    %108 = vmatpush1.msra.mxu0 0.0
    %109 = vmatprep.subr.mxu0 0.0
    %110 = vmatpush1.msra.mxu0 0.0
    %111 = vmatprep.subr.mxu0 0.0
    %112 = vmatpush1.msra.mxu0 0.0
    %113 = vmatprep.subr.mxu0 0.0
    %114 = vmatpush1.msra.mxu0 0.0
    %115 = vmatprep.subr.mxu0 0.0
    %116 = vmatpush1.msra.mxu0 0.0
    %117 = vmatprep.subr.mxu0 0.0
    %118 = vmatpush1.msra.mxu0 0.0
    %119 = vmatprep.subr.mxu0 0.0
    %120 = vmatpush1.msra.mxu0 0.0
    %121 = vmatprep.subr.mxu0 0.0
    %122 = vmatpush1.msra.mxu0 0.0
    %123 = vmatprep.subr.mxu0 0.0
    %124 = vmatpush1.msra.mxu0 0.0
    %125 = vmatprep.subr.mxu0 0.0
    %126 = vmatpush1.msra.mxu0 0.0
    %127 = vmatprep.subr.mxu0 0.0
    %128 = vmatpush1.msra.mxu0 0.0
    %129 = vmatprep.subr.mxu0 0.0
    %130 = vmatpush1.msra.mxu0 0.0
    %131 = vmatprep.subr.mxu0 0.0
    %132 = vmatpush1.msra.mxu0 0.0
    %133 = vmatprep.subr.mxu0 0.0
    %134 = vmatpush1.msra.mxu0 0.0
    %135 = vmatprep.subr.mxu0 0.0
    %136 = vmatpush1.msra.mxu0 0.0
    %137 = vmatprep.subr.mxu0 0.0
    %138 = vmatpush1.msra.mxu0 0.0
    %139 = vmatprep.subr.mxu0 0.0
    %140 = vmatpush1.msra.mxu0 0.0
    %141 = vmatprep.subr.mxu0 0.0
    %142 = vmatpush1.msra.mxu0 0.0
    %143 = vmatprep.subr.mxu0 0.0
    %144 = vmatpush1.msra.mxu0 0.0
    %145 = vmatprep.subr.mxu0 0.0
    %146 = vmatpush1.msra.mxu0 0.0
    %147 = vmatprep.subr.mxu0 0.0
    %148 = vmatpush1.msra.mxu0 0.0
    %149 = vmatprep.subr.mxu0 0.0
    %150 = vmatpush1.msra.mxu0 0.0
    %151 = vmatprep.subr.mxu0 0.0
    %152 = vmatpush1.msra.mxu0 0.0
    %153 = vmatprep.subr.mxu0 0.0
    %154 = vmatpush1.msra.mxu0 0.0
    %155 = vmatprep.mubr.f32.mxu0 0.0
    %156 = vmatmul.mubr.f32.gmra.mrb[0].mxu0 %v86
    %v157 = vpop.f32.mrb[0].mxu0
    %v158 = vadd.f32 %v82, %v157
    %v159 = vpop.f32.mrb[0].mxu0
    %160 = vdwg.mxu0
    %v161 = vxor.u32 %v158, 2147483648
    %v162 = vmul.f32 %v161, 1.442695
    %v163 = vpow.pop %v162
    %v164 = vadd.f32 %v163, 1.0
    %v165 = vrcp.pop %v164
    %v166 = vmul.f32 1.0, %v165
    %v167 = vmul.f32 %v158, %v166
    %168 = vst [vmem:[#allocation2] sm:$0xff] %v167
    // Predicated region
    $region18: #{tpu_custom_call.1} parent=1 // pred_check
      _
    $region19: #{tpu_custom_call.1} parent=1 // pred_check_branch
      %170 = sbr.rel (0) target = $region21
    $region20: #{tpu_custom_call.1} parent=1 // pred_region
      %s172 = ssub.s32 128, 128
      %173 = vsyncadd [#allocation3], %s172
      %s175 = sshll.u32 [#allocation2], 4
      %s176 = int_to_ptr.vmem [resolvable:$true] %s175
      %178 = dma.vmem_to_hbm [thread:$0]  %s176, 128, %s4, [#allocation3]
    $region21: #{tpu_custom_call.1} parent=1 // pred_fallthru
      _
    // Predicated region
    $region22: #{tpu_custom_call.1} parent=1 // pred_check
      _
    $region23: #{tpu_custom_call.1} parent=1 // pred_check_branch
      %180 = sbr.rel (0) target = $region25
    $region24: #{tpu_custom_call.1} parent=1 // pred_region
      %181 = dma.done [#allocation3], 128
    $region25: #{tpu_custom_call.1} parent=1 // pred_fallthru
      _
    %182 = vsyncpa [#allocation3], 1

</llo_original>
